<compile_context>
chip_gen: v6e
topology: v6e:2x2x1
jax: 0.10.0
libtpu: 0.0.40
codegen_flags: <defaults>
</compile_context>

<pallas_src>
import jax
import jax.numpy as jnp
from jax.experimental import pallas as pl
from jax.experimental.pallas import tpu as pltpu


def mlp_kernel(x_ref, w1_ref, b1_ref, w2_ref, b2_ref, o_ref):
    # Cast x tile to bf16 in-kernel (free VPU work under DMA slack; avoids a
    # separate wrapper-side HBM cast pass over the dominant input stream).
    x = x_ref[...].astype(jnp.bfloat16)
    # Layer 1: (TB, 784)bf16 @ (784, 128)bf16 -> f32 accumulation on the MXU.
    h = jnp.dot(x, w1_ref[...], preferred_element_type=jnp.float32)
    # Bias + ReLU in f32 on the VPU (v5e-safe: no bf16 elementwise needed).
    h = jnp.maximum(h + b1_ref[...], 0.0)
    # Layer 2: cast activations to bf16 for the MXU, accumulate in f32.
    out = jnp.dot(h.astype(jnp.bfloat16), w2_ref[...],
                  preferred_element_type=jnp.float32)
    # Store in bf16 (o_ref dtype) -> half the writeback bytes, still lane-dense.
    o_ref[...] = (out + b2_ref[...]).astype(o_ref.dtype)


def _pick_block_b(B):
    """Default batch tile: big enough to amortize ~0.35us/step grid overhead
    (512/1024-row tiles measured at ~85% of HBM roofline), but keep >= 2 grid
    steps so both v7x TensorCores get work; multiple of 16 (bf16 sublanes)."""
    target = 512
    if B >= 2 * target:
        return target
    if B >= 32:
        return max(16, ((B // 2) // 16) * 16)     # two grid steps
    return max(8, ((B + 7) // 8) * 8)             # single tile, sublane-padded


def mlp_forward(x, w1, b1, w2, b2, *, block_b=None, unpad=True):
    """x: (B, ...) flattened to (B, input_size); returns (B, num_classes) bf16.

    block_b: batch tile (rows per grid step); auto-picked if None.
    unpad:   if False, return the padded (b_pad, 128) buffer and let the
             consumer slice [:B, :num_classes] (XLA fuses the slice).
    """
    B = x.shape[0]
    x2d = x.reshape(B, -1)
    input_size = x2d.shape[1]
    hidden_size = w1.shape[1]
    num_classes = w2.shape[1]

    tb = int(block_b) if block_b is not None else _pick_block_b(B)
    b_pad = pl.cdiv(B, tb) * tb                  # pad batch to a tile multiple
    n_pad = pl.cdiv(num_classes, 128) * 128      # lane-dense output width

    # ---- wrapper-side layout plumbing (no extra pass over x when aligned) --
    if b_pad == B:
        x_in = x2d                               # zero-copy: kernel casts to bf16
    else:
        x_in = jnp.zeros((b_pad, input_size), x2d.dtype).at[:B].set(x2d)
    w1_b = w1.astype(jnp.bfloat16)
    b1_f = b1.reshape(1, hidden_size).astype(jnp.float32)
    w2_b = jnp.zeros((hidden_size, n_pad), jnp.bfloat16).at[:, :num_classes].set(
        w2.astype(jnp.bfloat16))
    b2_f = jnp.zeros((1, n_pad), jnp.float32).at[:, :num_classes].set(
        b2.reshape(1, num_classes).astype(jnp.float32))

    grid = (b_pad // tb,)

    flops = 2 * b_pad * (input_size * hidden_size + hidden_size * n_pad)
    bytes_accessed = (x_in.size * x_in.dtype.itemsize        # x read
                      + w1_b.size * 2 + w2_b.size * 2        # weights (once)
                      + b1_f.size * 4 + b2_f.size * 4        # biases (once)
                      + b_pad * n_pad * 2)                   # bf16 output write

    # VMEM is tiny here (weights ~232 KB, x tile at TB=512 bf16-equiv < 2 MB);
    # only raise the scoped-VMEM limit if a huge tile was explicitly requested
    # (v5e defaults to 16 MiB scoped VMEM).
    weights_bytes = w1_b.size * 2 + w2_b.size * 2 + b1_f.size * 4 + b2_f.size * 4
    vmem_needed = (2 * tb * input_size * x_in.dtype.itemsize   # x, double-buffered
                   + 2 * tb * n_pad * 2                        # out, double-buffered
                   + weights_bytes + (4 << 20))                # headroom
    vmem_limit = vmem_needed if vmem_needed > (14 << 20) else None

    out = pl.pallas_call(
        mlp_kernel,
        out_shape=jax.ShapeDtypeStruct((b_pad, n_pad), jnp.bfloat16),
        grid=grid,
        in_specs=[
            # x: streamed, one (tb, input_size) tile per grid step.
            pl.BlockSpec((tb, input_size), lambda i: (i, 0)),
            # Weights/biases: constant index_map -> DMA'd once, VMEM-resident.
            pl.BlockSpec((input_size, hidden_size), lambda i: (0, 0)),
            pl.BlockSpec((1, hidden_size), lambda i: (0, 0)),
            pl.BlockSpec((hidden_size, n_pad), lambda i: (0, 0)),
            pl.BlockSpec((1, n_pad), lambda i: (0, 0)),
        ],
        out_specs=pl.BlockSpec((tb, n_pad), lambda i: (i, 0)),
        compiler_params=pltpu.CompilerParams(
            # Batch tiles are independent: shard across TCs on v7x.
            dimension_semantics=("parallel",),
            vmem_limit_bytes=vmem_limit,
        ),
        cost_estimate=pl.CostEstimate(
            flops=flops, transcendentals=0, bytes_accessed=bytes_accessed),
    )(x_in, w1_b, b1_f, w2_b, b2_f)

    if not unpad:
        return out                    # consumer slices [:B, :num_classes]
    # With B % block_b == 0 this is a pure column slice (fuses under jit).
    return out[:B, :num_classes]


def init_params(key, input_size=784, hidden_size=128, num_classes=10):
    """Deterministic init matching torch.nn.Linear: U(-1/sqrt(fan_in), 1/sqrt(fan_in))."""
    k1, k2, k3, k4 = jax.random.split(key, 4)
    bound1 = 1.0 / (input_size ** 0.5)
    bound2 = 1.0 / (hidden_size ** 0.5)
    w1 = jax.random.uniform(k1, (input_size, hidden_size), jnp.float32, -bound1, bound1)
    b1 = jax.random.uniform(k2, (1, hidden_size), jnp.float32, -bound1, bound1)
    w2 = jax.random.uniform(k3, (hidden_size, num_classes), jnp.float32, -bound2, bound2)
    b2 = jax.random.uniform(k4, (1, num_classes), jnp.float32, -bound2, bound2)
    return w1, b1, w2, b2


if __name__ == "__main__":
    key = jax.random.PRNGKey(0)
    k_params, k_x = jax.random.split(key)

    input_size, hidden_size, num_classes = 784, 128, 10
    B = 128           # small batch; auto tile -> 64 rows, grid=(2,)

    w1, b1, w2, b2 = init_params(k_params, input_size, hidden_size, num_classes)

    # MNIST-like input: (B, 1, 28, 28) NCHW, flattened inside mlp_forward.
    x = jax.random.normal(k_x, (B, 1, 28, 28), jnp.float32)

    out = mlp_forward(x, w1, b1, w2, b2)
    out = jax.block_until_ready(out)
    assert out.shape == (B, num_classes)
    assert out.dtype == jnp.bfloat16
    out_f32 = out.astype(jnp.float32)

    # Reference 1: same bf16 rounding of x/W/h as the kernel (tight check;
    # only the final bf16 output rounding is unmodeled).
    x2d = x.reshape(B, -1)
    hp = jax.lax.Precision.HIGHEST
    xb = x2d.astype(jnp.bfloat16).astype(jnp.float32)
    w1b = w1.astype(jnp.bfloat16).astype(jnp.float32)
    w2b = w2.astype(jnp.bfloat16).astype(jnp.float32)
    h_ref = jnp.maximum(jnp.matmul(xb, w1b, precision=hp) + b1, 0.0)
    ref_bf16 = jnp.matmul(h_ref.astype(jnp.bfloat16).astype(jnp.float32),
                          w2b, precision=hp) + b2
    assert jnp.allclose(out_f32, ref_bf16, atol=2e-2, rtol=2e-2)

    # Reference 2: full-f32 math (loose sanity check on bf16 quantization error).
    ref_f32 = jnp.matmul(
        jnp.maximum(jnp.matmul(x2d, w1, precision=hp) + b1, 0.0),
        w2, precision=hp) + b2
    assert jnp.allclose(out_f32, ref_f32, atol=1e-1, rtol=1e-1)

    print("KERNEL_OK")
</pallas_src>

<mosaic_0001>
module attributes {stable_mosaic.version = 11 : i64} {
  func.func @mlp_kernel(%arg0: i32, %arg1: memref<64x784xf32, #tpu.memory_space<vmem>>, %arg2: memref<784x128xbf16, #tpu.memory_space<vmem>>, %arg3: memref<1x128xf32, #tpu.memory_space<vmem>>, %arg4: memref<128x128xbf16, #tpu.memory_space<vmem>>, %arg5: memref<1x128xf32, #tpu.memory_space<vmem>>, %arg6: memref<64x128xbf16, #tpu.memory_space<vmem>>) attributes {dimension_semantics = [#tpu.dimension_semantics<parallel>], iteration_bounds = array<i64: 2>, scalar_prefetch = 0 : i64, scratch_operands = 0 : i64, tpu.core_type = #tpu.core_type<tc>, window_params = [{transform_indices = @transform_0, window_bounds = array<i64: 64, 784>}, {pipeline_mode = #tpu.pipeline_mode<synchronous>, transform_indices = @transform_1, window_bounds = array<i64: 784, 128>}, {pipeline_mode = #tpu.pipeline_mode<synchronous>, transform_indices = @transform_2, window_bounds = array<i64: 1, 128>}, {pipeline_mode = #tpu.pipeline_mode<synchronous>, transform_indices = @transform_3, window_bounds = array<i64: 128, 128>}, {pipeline_mode = #tpu.pipeline_mode<synchronous>, transform_indices = @transform_4, window_bounds = array<i64: 1, 128>}, {transform_indices = @transform_5, window_bounds = array<i64: 64, 128>}]} {
    %c0 = arith.constant 0 : index
    %c0_0 = arith.constant 0 : index
    %0 = vector.load %arg1[%c0, %c0_0] : memref<64x784xf32, #tpu.memory_space<vmem>>, vector<64x784xf32>
    %1 = arith.truncf %0 : vector<64x784xf32> to vector<64x784xbf16>
    %c0_1 = arith.constant 0 : index
    %c0_2 = arith.constant 0 : index
    %2 = vector.load %arg2[%c0_1, %c0_2] : memref<784x128xbf16, #tpu.memory_space<vmem>>, vector<784x128xbf16>
    %cst = arith.constant dense<0.000000e+00> : vector<64x128xf32>
    %3 = tpu.matmul %1, %2, %cst {dimension_numbers = #tpu.dot_dimension_numbers<[1], [0], [0], [1], [0, 0, 1, 1], [], []>} : vector<64x784xbf16>, vector<784x128xbf16>, vector<64x128xf32> -> vector<64x128xf32>
    %c0_3 = arith.constant 0 : index
    %c0_4 = arith.constant 0 : index
    %4 = vector.load %arg3[%c0_3, %c0_4] : memref<1x128xf32, #tpu.memory_space<vmem>>, vector<1x128xf32>
    %5 = vector.broadcast %4 : vector<1x128xf32> to vector<64x128xf32>
    %6 = arith.addf %3, %5 : vector<64x128xf32>
    %cst_5 = arith.constant 0.000000e+00 : f32
    %7 = vector.broadcast %cst_5 : f32 to vector<64x128xf32>
    %8 = arith.maximumf %6, %7 : vector<64x128xf32>
    %9 = arith.truncf %8 : vector<64x128xf32> to vector<64x128xbf16>
    %c0_6 = arith.constant 0 : index
    %c0_7 = arith.constant 0 : index
    %10 = vector.load %arg4[%c0_6, %c0_7] : memref<128x128xbf16, #tpu.memory_space<vmem>>, vector<128x128xbf16>
    %cst_8 = arith.constant dense<0.000000e+00> : vector<64x128xf32>
    %11 = tpu.matmul %9, %10, %cst_8 {dimension_numbers = #tpu.dot_dimension_numbers<[1], [0], [0], [1], [0, 0, 1, 1], [], []>} : vector<64x128xbf16>, vector<128x128xbf16>, vector<64x128xf32> -> vector<64x128xf32>
    %c0_9 = arith.constant 0 : index
    %c0_10 = arith.constant 0 : index
    %12 = vector.load %arg5[%c0_9, %c0_10] : memref<1x128xf32, #tpu.memory_space<vmem>>, vector<1x128xf32>
    %13 = vector.broadcast %12 : vector<1x128xf32> to vector<64x128xf32>
    %14 = arith.addf %11, %13 : vector<64x128xf32>
    %15 = arith.truncf %14 : vector<64x128xf32> to vector<64x128xbf16>
    %c0_11 = arith.constant 0 : index
    %c0_12 = arith.constant 0 : index
    %16 = vector.load %arg6[%c0_11, %c0_12] : memref<64x128xbf16, #tpu.memory_space<vmem>>, vector<64x128xbf16>
    tpu.vector_store %arg6[%c0_11, %c0_12], %15 {strides = array<i32>} : memref<64x128xbf16, #tpu.memory_space<vmem>>, vector<64x128xbf16>,
    return
  }
  func.func @transform_0(%arg0: i32) -> (i32, i32) {
    %c0_i32 = arith.constant 0 : i32
    %c0_i32_0 = arith.constant 0 : i32
    return %arg0, %c0_i32 : i32, i32
  }
  func.func @transform_1(%arg0: i32) -> (i32, i32) {
    %c0_i32 = arith.constant 0 : i32
    %c0_i32_0 = arith.constant 0 : i32
    %c0_i32_1 = arith.constant 0 : i32
    return %c0_i32, %c0_i32_0 : i32, i32
  }
  func.func @transform_2(%arg0: i32) -> (i32, i32) {
    %c0_i32 = arith.constant 0 : i32
    %c0_i32_0 = arith.constant 0 : i32
    %c0_i32_1 = arith.constant 0 : i32
    return %c0_i32, %c0_i32_0 : i32, i32
  }
  func.func @transform_3(%arg0: i32) -> (i32, i32) {
    %c0_i32 = arith.constant 0 : i32
    %c0_i32_0 = arith.constant 0 : i32
    %c0_i32_1 = arith.constant 0 : i32
    return %c0_i32, %c0_i32_0 : i32, i32
  }
  func.func @transform_4(%arg0: i32) -> (i32, i32) {
    %c0_i32 = arith.constant 0 : i32
    %c0_i32_0 = arith.constant 0 : i32
    %c0_i32_1 = arith.constant 0 : i32
    return %c0_i32, %c0_i32_0 : i32, i32
  }
  func.func @transform_5(%arg0: i32) -> (i32, i32) {
    %c0_i32 = arith.constant 0 : i32
    %c0_i32_0 = arith.constant 0 : i32
    return %arg0, %c0_i32 : i32, i32
  }
}

</mosaic_0001>

<llo_original>
// kernel: tpu_custom_call.1
$region0: #{tpu_custom_call.1}
  #allocation0 [shape = 'u32[]', space=smem, size = 0x4, offset = 0x4, fixed_abs, tag = 'smem constant byte address 0x4 - core index']
  #allocation1 [shape = 'u32[144,128]{1,0:T(1,128)}', space=vmem, size = 0x12000, scoped, tag = 'internal scratch']
  %s0 = inlined_call_operand.vmem [shape: f32[128,784], index: 0, kind: input, shape index: {}]
  %s1 = inlined_call_operand.vmem [shape: bf16[784,128], index: 1, kind: input, shape index: {}]
  %s2 = inlined_call_operand.vmem [shape: f32[1,128], index: 2, kind: input, shape index: {}]
  %s3 = inlined_call_operand.vmem [shape: bf16[128,128], index: 3, kind: input, shape index: {}]
  %s4 = inlined_call_operand.vmem [shape: f32[1,128], index: 4, kind: input, shape index: {}]
  %s5 = inlined_call_operand.hbm [shape: bf16[128,128], index: 5, kind: output, shape index: {}]
  %s6 = sld [smem:[#allocation0]]
  $region53: #{tpu_custom_call.1} parent=0
    _
  %s8 = ssub.s32 1, %s6
  %s9 = scalar_select 0, %s8, %s6
  $region1: #{tpu_custom_call.1} parent=0
    #allocation2 [shape = 'u8[32768]{0}', space=vmem, size = 0x8000, scoped, tag = 'output window, operand 0']
    #allocation3 [shape = 's32[2]{0}', space=sflag, size = 0x8, scoped, tag = 'scoped memory for tpu_custom_call.1']
    %10 = vsyncpa [#allocation3], 0
    %s11 = scalar_lea.sflag [#allocation3], 1
    %12 = vsyncpa %s11, 0
    loop: start=0, step=1, limit=4
    $region2: #{tpu_custom_call.1} parent=1 // loop_pre_header
      _
    $region3: #{tpu_custom_call.1} parent=1 // loop_header
      %s14 = sphi 0, %s18
      %p15 = scmp.ge.s32.totalorder %s14, 4
      %s24 = sphi 0, %s26
      %s27 = sphi 0, %s24
      %s28 = sphi 0, %s27
      %s44 = sphi 0, %s28
      %s48 = sphi 0, %s48
      %s50 = sphi 0, %s48
      %s51 = sphi 0, %s50
      %s65 = sphi 0, %s51
      %s69 = sphi 0, %s69
      %s71 = sphi 0, %s69
      %s72 = sphi 0, %s71
      %s86 = sphi 0, %s72
      %s90 = sphi 0, %s90
      %s92 = sphi 0, %s90
      %s93 = sphi 0, %s92
      %s107 = sphi 0, %s93
      %s111 = sphi 0, %s111
      %s113 = sphi 0, %s111
      %s114 = sphi 0, %s113
      %s128 = sphi 0, %s114
      %s134 = sphi 0, %s136
      %s137 = sphi 0, %s134
      %s138 = sphi 0, %s137
      %s154 = sphi 0, %s138
    $region4: #{tpu_custom_call.1} parent=1 // loop_header_branch
      %17 = sbr.rel (%p15) target = $region8
    $region5: #{tpu_custom_call.1} parent=1 // loop_body
      %s19 = ssub.s32 %s14, 1
      %s20 = ssub.s32 %s14, 2
      %s21 = sadd.s32 %s14, 1
      %s22 = ssub.s32 %s14, %s21
      %p23 = scmp.eq.s32.totalorder %s22, 0
      %s25 = sadd.s32 %s24, 1
      %s26 = scalar_select %p23, %s24, %s25
      %p29 = pneg %p23
      %p30 = scmp.eq.s32.totalorder %s14, 1
      %p31 = por %p29, %p30
      %p32 = scmp.ne.s32.totalorder %s24, %s27
      %p33 = scmp.eq.s32.totalorder %s14, 0
      %p34 = por %p32, %p33
      %p35 = scmp.ne.s32.totalorder %s24, %s27
      %p36 = scmp.eq.s32.totalorder %s19, 1
      %p37 = por %p35, %p36
      %p38 = scmp.ne.s32.totalorder %s27, %s28
      %p39 = scmp.eq.s32.totalorder %s19, 0
      %p40 = por %p38, %p39
      %p41 = scmp.ne.s32.totalorder %s27, %s28
      %p42 = scmp.eq.s32.totalorder %s20, 1
      %p43 = por %p41, %p42
      %p45 = scmp.ne.s32.totalorder %s28, %s44
      %p46 = scmp.eq.s32.totalorder %s20, 0
      %p47 = por %p45, %p46
      %s49 = sadd.s32 %s48, 1
      %p52 = scmp.eq.s32.totalorder %s14, 1
      %p53 = scmp.ne.s32.totalorder %s48, %s50
      %p54 = scmp.eq.s32.totalorder %s14, 0
      %p55 = por %p53, %p54
      %p56 = scmp.ne.s32.totalorder %s48, %s50
      %p57 = scmp.eq.s32.totalorder %s19, 1
      %p58 = por %p56, %p57
      %p59 = scmp.ne.s32.totalorder %s50, %s51
      %p60 = scmp.eq.s32.totalorder %s19, 0
      %p61 = por %p59, %p60
      %p62 = scmp.ne.s32.totalorder %s50, %s51
      %p63 = scmp.eq.s32.totalorder %s20, 1
      %p64 = por %p62, %p63
      %p66 = scmp.ne.s32.totalorder %s51, %s65
      %p67 = scmp.eq.s32.totalorder %s20, 0
      %p68 = por %p66, %p67
      %s70 = sadd.s32 %s69, 1
      %p73 = scmp.eq.s32.totalorder %s14, 1
      %p74 = scmp.ne.s32.totalorder %s69, %s71
      %p75 = scmp.eq.s32.totalorder %s14, 0
      %p76 = por %p74, %p75
      %p77 = scmp.ne.s32.totalorder %s69, %s71
      %p78 = scmp.eq.s32.totalorder %s19, 1
      %p79 = por %p77, %p78
      %p80 = scmp.ne.s32.totalorder %s71, %s72
      %p81 = scmp.eq.s32.totalorder %s19, 0
      %p82 = por %p80, %p81
      %p83 = scmp.ne.s32.totalorder %s71, %s72
      %p84 = scmp.eq.s32.totalorder %s20, 1
      %p85 = por %p83, %p84
      %p87 = scmp.ne.s32.totalorder %s72, %s86
      %p88 = scmp.eq.s32.totalorder %s20, 0
      %p89 = por %p87, %p88
      %s91 = sadd.s32 %s90, 1
      %p94 = scmp.eq.s32.totalorder %s14, 1
      %p95 = scmp.ne.s32.totalorder %s90, %s92
      %p96 = scmp.eq.s32.totalorder %s14, 0
      %p97 = por %p95, %p96
      %p98 = scmp.ne.s32.totalorder %s90, %s92
      %p99 = scmp.eq.s32.totalorder %s19, 1
      %p100 = por %p98, %p99
      %p101 = scmp.ne.s32.totalorder %s92, %s93
      %p102 = scmp.eq.s32.totalorder %s19, 0
      %p103 = por %p101, %p102
      %p104 = scmp.ne.s32.totalorder %s92, %s93
      %p105 = scmp.eq.s32.totalorder %s20, 1
      %p106 = por %p104, %p105
      %p108 = scmp.ne.s32.totalorder %s93, %s107
      %p109 = scmp.eq.s32.totalorder %s20, 0
      %p110 = por %p108, %p109
      %s112 = sadd.s32 %s111, 1
      %p115 = scmp.eq.s32.totalorder %s14, 1
      %p116 = scmp.ne.s32.totalorder %s111, %s113
      %p117 = scmp.eq.s32.totalorder %s14, 0
      %p118 = por %p116, %p117
      %p119 = scmp.ne.s32.totalorder %s111, %s113
      %p120 = scmp.eq.s32.totalorder %s19, 1
      %p121 = por %p119, %p120
      %p122 = scmp.ne.s32.totalorder %s113, %s114
      %p123 = scmp.eq.s32.totalorder %s19, 0
      %p124 = por %p122, %p123
      %p125 = scmp.ne.s32.totalorder %s113, %s114
      %p126 = scmp.eq.s32.totalorder %s20, 1
      %p127 = por %p125, %p126
      %p129 = scmp.ne.s32.totalorder %s114, %s128
      %p130 = scmp.eq.s32.totalorder %s20, 0
      %p131 = por %p129, %p130
      %s132 = ssub.s32 %s14, %s21
      %p133 = scmp.eq.s32.totalorder %s132, 0
      %s135 = sadd.s32 %s134, 1
      %s136 = scalar_select %p133, %s134, %s135
      %p139 = pneg %p133
      %p140 = scmp.eq.s32.totalorder %s14, 1
      %p141 = por %p139, %p140
      %p142 = scmp.ne.s32.totalorder %s134, %s137
      %p143 = scmp.eq.s32.totalorder %s14, 0
      %p144 = por %p142, %p143
      %p145 = scmp.ne.s32.totalorder %s134, %s137
      %p146 = scmp.eq.s32.totalorder %s19, 1
      %p147 = por %p145, %p146
      %p148 = scmp.ne.s32.totalorder %s137, %s138
      %p149 = scmp.eq.s32.totalorder %s19, 0
      %p150 = por %p148, %p149
      %p151 = scmp.ne.s32.totalorder %s137, %s138
      %p152 = scmp.eq.s32.totalorder %s20, 1
      %p153 = por %p151, %p152
      %p155 = scmp.ne.s32.totalorder %s138, %s154
      %p156 = scmp.eq.s32.totalorder %s20, 0
      %p157 = por %p155, %p156
      %p158 = scmp.le.s32.totalorder 1, %s14
      %p159 = scmp.lt.s32.totalorder %s14, 3
      %p160 = pnand %p158, %p159
      %p161 = pneg %p160
      // Predicated region
      $region9: #{tpu_custom_call.1} parent=5 // pred_check
        _
      $region10: #{tpu_custom_call.1} parent=5 // pred_check_branch
        %163 = sbr.rel (%p160) target = $region12
      $region11: #{tpu_custom_call.1} parent=5 // pred_region
        %s164 = ssub.s32 %s14, 1
        // Predicated region
        $region13: #{tpu_custom_call.1} parent=11 // pred_check
          %p165 = pneg %p61
        $region14: #{tpu_custom_call.1} parent=11 // pred_check_branch
          %167 = sbr.rel (%p165) target = $region16
        $region15: #{tpu_custom_call.1} parent=11 // pred_region
          _
        $region16: #{tpu_custom_call.1} parent=11 // pred_fallthru
          _
        // Predicated region
        $region17: #{tpu_custom_call.1} parent=11 // pred_check
          %p168 = pneg %p82
        $region18: #{tpu_custom_call.1} parent=11 // pred_check_branch
          %170 = sbr.rel (%p168) target = $region20
        $region19: #{tpu_custom_call.1} parent=11 // pred_region
          _
        $region20: #{tpu_custom_call.1} parent=11 // pred_fallthru
          _
        // Predicated region
        $region21: #{tpu_custom_call.1} parent=11 // pred_check
          %p171 = pneg %p103
        $region22: #{tpu_custom_call.1} parent=11 // pred_check_branch
          %173 = sbr.rel (%p171) target = $region24
        $region23: #{tpu_custom_call.1} parent=11 // pred_region
          _
        $region24: #{tpu_custom_call.1} parent=11 // pred_fallthru
          _
        // Predicated region
        $region25: #{tpu_custom_call.1} parent=11 // pred_check
          %p174 = pneg %p124
        $region26: #{tpu_custom_call.1} parent=11 // pred_check_branch
          %176 = sbr.rel (%p174) target = $region28
        $region27: #{tpu_custom_call.1} parent=11 // pred_region
          _
        $region28: #{tpu_custom_call.1} parent=11 // pred_fallthru
          _
      $region12: #{tpu_custom_call.1} parent=5 // pred_fallthru
        _
      %p177 = scmp.lt.s32.totalorder %s14, 2
      // Predicated region
      $region29: #{tpu_custom_call.1} parent=5 // pred_check
        %p178 = pneg %p177
      $region30: #{tpu_custom_call.1} parent=5 // pred_check_branch
        %180 = sbr.rel (%p178) target = $region32
      $region31: #{tpu_custom_call.1} parent=5 // pred_region
        // Predicated region
        $region33: #{tpu_custom_call.1} parent=31 // pred_check
          %p181 = pneg %p34
        $region34: #{tpu_custom_call.1} parent=31 // pred_check_branch
          %183 = sbr.rel (%p181) target = $region36
        $region35: #{tpu_custom_call.1} parent=31 // pred_region
          %s184 = smul.u32 8, %s14
          %p185 = scmp.lt.s32.totalorder %s184, 15
          %s186 = scalar_select %p185, %s184, 15
          %s187 = smul.addr %s186, 7
          %s188 = smul.addr %s187, 8
          %s189 = scalar_lea.vmem %s0, %s188
          %s190 = smul.u32 8, %s14
        $region36: #{tpu_custom_call.1} parent=31 // pred_fallthru
          _
      $region32: #{tpu_custom_call.1} parent=5 // pred_fallthru
        _
      %p191 = scmp.le.s32.totalorder 1, %s14
      %p192 = scmp.lt.s32.totalorder %s14, 3
      %p193 = pnand %p191, %p192
      %p194 = pneg %p193
      // Predicated region
      $region37: #{tpu_custom_call.1} parent=5 // pred_check
        _
      $region38: #{tpu_custom_call.1} parent=5 // pred_check_branch
        %196 = sbr.rel (%p193) target = $region40
      $region39: #{tpu_custom_call.1} parent=5 // pred_region
        %s197 = ssub.s32 %s14, 1
        %s198 = smul.u32 8, %s19
        %p199 = scmp.lt.s32.totalorder %s198, 15
        %s200 = scalar_select %p199, %s198, 15
        %s201 = smul.addr %s200, 7
        %s202 = smul.addr %s201, 8
        %s203 = scalar_lea.vmem %s0, %s202
        %p204 = pneg %p40
        %p205 = pneg %p37
        %p206 = pneg %p61
        %p207 = pneg %p58
        %p208 = pneg %p82
        %p209 = pneg %p79
        %p210 = pneg %p103
        %p211 = pneg %p100
        %p212 = pneg %p124
        %p213 = pneg %p121
        %p214 = pneg %p150
        %p215 = pneg %p147
        %s216 = sand.u32 %s137, 1
        %s217 = scalar_lea.sflag [#allocation3], %s216
        %s218 = sand.u32 %s137, 1
        %s219 = smul.addr %s218, 32
        %s220 = scalar_lea.vmem [#allocation2], %s219
        %s221 = smul.u32 8, %s19
        %p222 = scmp.lt.s32.totalorder %s221, 15
        %s223 = scalar_select %p222, %s221, 15
        %s224 = smul.addr %s223, 7
        %s225 = smul.addr %s224, 8
        %s226 = scalar_lea.vmem %s0, %s225
        %s227 = smul.u32 8, %s19
        %s228 = smul.u32 8, %s19
        %v230 = vld [vmem:[%s226] sm:$0xff]
        %v231 = vld [vmem:[%s226 + $0x8] sm:$0xff]
        %v232 = vld [vmem:[%s226 + $0x10] sm:$0xff]
        %v233 = vld [vmem:[%s226 + $0x18] sm:$0xff]
        %v234 = vld [vmem:[%s226 + $0x20] sm:$0xff]
        %v235 = vld [vmem:[%s226 + $0x28] sm:$0xff]
        %v236 = vld [vmem:[%s226 + $0x30] sm:$0xff]
        %v237 = vld [vmem:[%s226 + $0x38] sm:$0xff]
        %v238 = vld [vmem:[%s226 + $0x40] sm:$0xff]
        %v239 = vld [vmem:[%s226 + $0x48] sm:$0xff]
        %v240 = vld [vmem:[%s226 + $0x50] sm:$0xff]
        %v241 = vld [vmem:[%s226 + $0x58] sm:$0xff]
        %v242 = vld [vmem:[%s226 + $0x60] sm:$0xff]
        %v243 = vld [vmem:[%s226 + $0x68] sm:$0xff]
        %v244 = vld [vmem:[%s226 + $0x70] sm:$0xff]
        %v245 = vld [vmem:[%s226 + $0x78] sm:$0xff]
        %v246 = vld [vmem:[%s226 + $0x80] sm:$0xff]
        %v247 = vld [vmem:[%s226 + $0x88] sm:$0xff]
        %v248 = vld [vmem:[%s226 + $0x90] sm:$0xff]
        %v249 = vld [vmem:[%s226 + $0x98] sm:$0xff]
        %v250 = vld [vmem:[%s226 + $0xa0] sm:$0xff]
        %v251 = vld [vmem:[%s226 + $0xa8] sm:$0xff]
        %v252 = vld [vmem:[%s226 + $0xb0] sm:$0xff]
        %v253 = vld [vmem:[%s226 + $0xb8] sm:$0xff]
        %v254 = vld [vmem:[%s226 + $0xc0] sm:$0xff]
        %v255 = vld [vmem:[%s226 + $0xc8] sm:$0xff]
        %v256 = vld [vmem:[%s226 + $0xd0] sm:$0xff]
        %v257 = vld [vmem:[%s226 + $0xd8] sm:$0xff]
        %v258 = vld [vmem:[%s226 + $0xe0] sm:$0xff]
        %v259 = vld [vmem:[%s226 + $0xe8] sm:$0xff]
        %v260 = vld [vmem:[%s226 + $0xf0] sm:$0xff]
        %v261 = vld [vmem:[%s226 + $0xf8] sm:$0xff]
        %v262 = vld [vmem:[%s226 + $0x100] sm:$0xff]
        %v263 = vld [vmem:[%s226 + $0x108] sm:$0xff]
        %v264 = vld [vmem:[%s226 + $0x110] sm:$0xff]
        %v265 = vld [vmem:[%s226 + $0x118] sm:$0xff]
        %v266 = vld [vmem:[%s226 + $0x120] sm:$0xff]
        %v267 = vld [vmem:[%s226 + $0x128] sm:$0xff]
        %v268 = vld [vmem:[%s226 + $0x130] sm:$0xff]
        %v269 = vld [vmem:[%s226 + $0x138] sm:$0xff]
        %v270 = vld [vmem:[%s226 + $0x140] sm:$0xff]
        %v271 = vld [vmem:[%s226 + $0x148] sm:$0xff]
        %v272 = vld [vmem:[%s226 + $0x150] sm:$0xff]
        %v273 = vld [vmem:[%s226 + $0x158] sm:$0xff]
        %v274 = vld [vmem:[%s226 + $0x160] sm:$0xff]
        %v275 = vld [vmem:[%s226 + $0x168] sm:$0xff]
        %v276 = vld [vmem:[%s226 + $0x170] sm:$0xff]
        %v277 = vld [vmem:[%s226 + $0x178] sm:$0xff]
        %v278 = vld [vmem:[%s226 + $0x180] sm:$0xff]
        %v279 = vld [vmem:[%s226 + $0x188] sm:$0xff]
        %v280 = vld [vmem:[%s226 + $0x190] sm:$0xff]
        %v281 = vld [vmem:[%s226 + $0x198] sm:$0xff]
        %v282 = vld [vmem:[%s226 + $0x1a0] sm:$0xff]
        %v283 = vld [vmem:[%s226 + $0x1a8] sm:$0xff]
        %v284 = vld [vmem:[%s226 + $0x1b0] sm:$0xff]
        %v285 = vld [vmem:[%s226 + $0x1b8] sm:$0xff]
        %v286 = vpack.c.bf16 %v237, %v230
        %v287 = vpack.c.bf16 %v238, %v231
        %v288 = vpack.c.bf16 %v239, %v232
        %v289 = vpack.c.bf16 %v240, %v233
        %v290 = vpack.c.bf16 %v241, %v234
        %v291 = vpack.c.bf16 %v242, %v235
        %v292 = vpack.c.bf16 %v243, %v236
        %v293 = vpack.c.bf16 %v251, %v244
        %v294 = vpack.c.bf16 %v252, %v245
        %v295 = vpack.c.bf16 %v253, %v246
        %v296 = vpack.c.bf16 %v254, %v247
        %v297 = vpack.c.bf16 %v255, %v248
        %v298 = vpack.c.bf16 %v256, %v249
        %v299 = vpack.c.bf16 %v257, %v250
        %v300 = vpack.c.bf16 %v265, %v258
        %v301 = vpack.c.bf16 %v266, %v259
        %v302 = vpack.c.bf16 %v267, %v260
        %v303 = vpack.c.bf16 %v268, %v261
        %v304 = vpack.c.bf16 %v269, %v262
        %v305 = vpack.c.bf16 %v270, %v263
        %v306 = vpack.c.bf16 %v271, %v264
        %v307 = vpack.c.bf16 %v279, %v272
        %v308 = vpack.c.bf16 %v280, %v273
        %v309 = vpack.c.bf16 %v281, %v274
        %v310 = vpack.c.bf16 %v282, %v275
        %v311 = vpack.c.bf16 %v283, %v276
        %v312 = vpack.c.bf16 %v284, %v277
        %v313 = vpack.c.bf16 %v285, %v278
        %v314 = vld [vmem:[%s1] sm:$0xf]
        %v315 = vld [vmem:[%s1 + $0x4] sm:$0xf]
        %v316 = vld [vmem:[%s1 + $0x8] sm:$0xf]
        %v317 = vld [vmem:[%s1 + $0xc] sm:$0xf]
        %v318 = vld [vmem:[%s1 + $0x10] sm:$0xf]
        %v319 = vld [vmem:[%s1 + $0x14] sm:$0xf]
        %v320 = vld [vmem:[%s1 + $0x18] sm:$0xf]
        %v321 = vld [vmem:[%s1 + $0x1c] sm:$0xf]
        %v322 = vld [vmem:[%s1 + $0x20] sm:$0xf]
        %v323 = vld [vmem:[%s1 + $0x24] sm:$0xf]
        %v324 = vld [vmem:[%s1 + $0x28] sm:$0xf]
        %v325 = vld [vmem:[%s1 + $0x2c] sm:$0xf]
        %v326 = vld [vmem:[%s1 + $0x30] sm:$0xf]
        %v327 = vld [vmem:[%s1 + $0x34] sm:$0xf]
        %v328 = vld [vmem:[%s1 + $0x38] sm:$0xf]
        %v329 = vld [vmem:[%s1 + $0x3c] sm:$0xf]
        %v330 = vld [vmem:[%s1 + $0x40] sm:$0xf]
        %v331 = vld [vmem:[%s1 + $0x44] sm:$0xf]
        %v332 = vld [vmem:[%s1 + $0x48] sm:$0xf]
        %v333 = vld [vmem:[%s1 + $0x4c] sm:$0xf]
        %v334 = vld [vmem:[%s1 + $0x50] sm:$0xf]
        %v335 = vld [vmem:[%s1 + $0x54] sm:$0xf]
        %v336 = vld [vmem:[%s1 + $0x58] sm:$0xf]
        %v337 = vld [vmem:[%s1 + $0x5c] sm:$0xf]
        %v338 = vld [vmem:[%s1 + $0x60] sm:$0xf]
        %v339 = vld [vmem:[%s1 + $0x64] sm:$0xf]
        %v340 = vld [vmem:[%s1 + $0x68] sm:$0xf]
        %v341 = vld [vmem:[%s1 + $0x6c] sm:$0xf]
        %v342 = vld [vmem:[%s1 + $0x70] sm:$0xf]
        %v343 = vld [vmem:[%s1 + $0x74] sm:$0xf]
        %v344 = vld [vmem:[%s1 + $0x78] sm:$0xf]
        %v345 = vld [vmem:[%s1 + $0x7c] sm:$0xf]
        %v346 = vld [vmem:[%s1 + $0x80] sm:$0xf]
        %v347 = vld [vmem:[%s1 + $0x84] sm:$0xf]
        %v348 = vld [vmem:[%s1 + $0x88] sm:$0xf]
        %v349 = vld [vmem:[%s1 + $0x8c] sm:$0xf]
        %v350 = vld [vmem:[%s1 + $0x90] sm:$0xf]
        %v351 = vld [vmem:[%s1 + $0x94] sm:$0xf]
        %v352 = vld [vmem:[%s1 + $0x98] sm:$0xf]
        %v353 = vld [vmem:[%s1 + $0x9c] sm:$0xf]
        %v354 = vld [vmem:[%s1 + $0xa0] sm:$0xf]
        %v355 = vld [vmem:[%s1 + $0xa4] sm:$0xf]
        %v356 = vld [vmem:[%s1 + $0xa8] sm:$0xf]
        %v357 = vld [vmem:[%s1 + $0xac] sm:$0xf]
        %v358 = vld [vmem:[%s1 + $0xb0] sm:$0xf]
        %v359 = vld [vmem:[%s1 + $0xb4] sm:$0xf]
        %v360 = vld [vmem:[%s1 + $0xb8] sm:$0xf]
        %v361 = vld [vmem:[%s1 + $0xbc] sm:$0xf]
        %v362 = vld [vmem:[%s1 + $0xc0] sm:$0xf]
        %v363 = vld [vmem:[%s1 + $0xc4] sm:$0xf]
        %v364 = vld [vmem:[%s1 + $0xc8] sm:$0xf]
        %v365 = vld [vmem:[%s1 + $0xcc] sm:$0xf]
        %v366 = vld [vmem:[%s1 + $0xd0] sm:$0xf]
        %v367 = vld [vmem:[%s1 + $0xd4] sm:$0xf]
        %v368 = vld [vmem:[%s1 + $0xd8] sm:$0xf]
        %v369 = vld [vmem:[%s1 + $0xdc] sm:$0xf]
        %v370 = vld [vmem:[%s1 + $0xe0] sm:$0xf]
        %v371 = vld [vmem:[%s1 + $0xe4] sm:$0xf]
        %v372 = vld [vmem:[%s1 + $0xe8] sm:$0xf]
        %v373 = vld [vmem:[%s1 + $0xec] sm:$0xf]
        %v374 = vld [vmem:[%s1 + $0xf0] sm:$0xf]
        %v375 = vld [vmem:[%s1 + $0xf4] sm:$0xf]
        %v376 = vld [vmem:[%s1 + $0xf8] sm:$0xf]
        %v377 = vld [vmem:[%s1 + $0xfc] sm:$0xf]
        %v378 = vld [vmem:[%s1 + $0x100] sm:$0xf]
        %v379 = vld [vmem:[%s1 + $0x104] sm:$0xf]
        %v380 = vld [vmem:[%s1 + $0x108] sm:$0xf]
        %v381 = vld [vmem:[%s1 + $0x10c] sm:$0xf]
        %v382 = vld [vmem:[%s1 + $0x110] sm:$0xf]
        %v383 = vld [vmem:[%s1 + $0x114] sm:$0xf]
        %v384 = vld [vmem:[%s1 + $0x118] sm:$0xf]
        %v385 = vld [vmem:[%s1 + $0x11c] sm:$0xf]
        %v386 = vld [vmem:[%s1 + $0x120] sm:$0xf]
        %v387 = vld [vmem:[%s1 + $0x124] sm:$0xf]
        %v388 = vld [vmem:[%s1 + $0x128] sm:$0xf]
        %v389 = vld [vmem:[%s1 + $0x12c] sm:$0xf]
        %v390 = vld [vmem:[%s1 + $0x130] sm:$0xf]
        %v391 = vld [vmem:[%s1 + $0x134] sm:$0xf]
        %v392 = vld [vmem:[%s1 + $0x138] sm:$0xf]
        %v393 = vld [vmem:[%s1 + $0x13c] sm:$0xf]
        %v394 = vld [vmem:[%s1 + $0x140] sm:$0xf]
        %v395 = vld [vmem:[%s1 + $0x144] sm:$0xf]
        %v396 = vld [vmem:[%s1 + $0x148] sm:$0xf]
        %v397 = vld [vmem:[%s1 + $0x14c] sm:$0xf]
        %v398 = vld [vmem:[%s1 + $0x150] sm:$0xf]
        %v399 = vld [vmem:[%s1 + $0x154] sm:$0xf]
        %v400 = vld [vmem:[%s1 + $0x158] sm:$0xf]
        %v401 = vld [vmem:[%s1 + $0x15c] sm:$0xf]
        %v402 = vld [vmem:[%s1 + $0x160] sm:$0xf]
        %v403 = vld [vmem:[%s1 + $0x164] sm:$0xf]
        %v404 = vld [vmem:[%s1 + $0x168] sm:$0xf]
        %v405 = vld [vmem:[%s1 + $0x16c] sm:$0xf]
        %v406 = vld [vmem:[%s1 + $0x170] sm:$0xf]
        %v407 = vld [vmem:[%s1 + $0x174] sm:$0xf]
        %v408 = vld [vmem:[%s1 + $0x178] sm:$0xf]
        %v409 = vld [vmem:[%s1 + $0x17c] sm:$0xf]
        %v410 = vld [vmem:[%s1 + $0x180] sm:$0xf]
        %v411 = vld [vmem:[%s1 + $0x184] sm:$0xf]
        %v412 = vld [vmem:[%s2] sm:$0x1]
        %v414 = vlaneseq
        %v415 = vshrl.u32 %v414, 7
        %v416 = vsub.s32 0, %v415
        %v417 = vrot.slane %v412, %v416
        %v517 = vunpack.c.l.b16 %v314
        %v518 = vunpack.c.l.b16 %v315
        %v519 = vunpack.c.l.b16 %v316
        %v520 = vunpack.c.l.b16 %v317
        %v521 = vunpack.c.l.b16 %v318
        %v522 = vunpack.c.l.b16 %v319
        %v523 = vunpack.c.l.b16 %v320
        %v524 = vunpack.c.l.b16 %v321
        %v525 = vunpack.c.l.b16 %v322
        %v526 = vunpack.c.l.b16 %v323
        %v527 = vunpack.c.l.b16 %v324
        %v528 = vunpack.c.l.b16 %v325
        %v529 = vunpack.c.l.b16 %v326
        %v530 = vunpack.c.l.b16 %v327
        %v531 = vunpack.c.l.b16 %v328
        %v532 = vunpack.c.l.b16 %v329
        %v533 = vunpack.c.l.b16 %v330
        %v534 = vunpack.c.l.b16 %v331
        %v535 = vunpack.c.l.b16 %v332
        %v536 = vunpack.c.l.b16 %v333
        %v537 = vunpack.c.l.b16 %v334
        %v538 = vunpack.c.l.b16 %v335
        %v539 = vunpack.c.l.b16 %v336
        %v540 = vunpack.c.l.b16 %v337
        %v541 = vunpack.c.l.b16 %v338
        %v542 = vunpack.c.l.b16 %v339
        %v543 = vunpack.c.l.b16 %v340
        %v544 = vunpack.c.l.b16 %v341
        %v545 = vunpack.c.l.b16 %v342
        %v546 = vunpack.c.l.b16 %v343
        %v547 = vunpack.c.l.b16 %v344
        %v548 = vunpack.c.l.b16 %v345
        %v549 = vunpack.c.l.b16 %v346
        %v550 = vunpack.c.l.b16 %v347
        %v551 = vunpack.c.l.b16 %v348
        %v552 = vunpack.c.l.b16 %v349
        %v553 = vunpack.c.l.b16 %v350
        %v554 = vunpack.c.l.b16 %v351
        %v555 = vunpack.c.l.b16 %v352
        %v556 = vunpack.c.l.b16 %v353
        %v557 = vunpack.c.l.b16 %v354
        %v558 = vunpack.c.l.b16 %v355
        %v559 = vunpack.c.l.b16 %v356
        %v560 = vunpack.c.l.b16 %v357
        %v561 = vunpack.c.l.b16 %v358
        %v562 = vunpack.c.l.b16 %v359
        %v563 = vunpack.c.l.b16 %v360
        %v564 = vunpack.c.l.b16 %v361
        %v565 = vunpack.c.l.b16 %v362
        %v566 = vunpack.c.l.b16 %v363
        %v567 = vunpack.c.l.b16 %v364
        %v568 = vunpack.c.l.b16 %v365
        %v569 = vunpack.c.l.b16 %v366
        %v570 = vunpack.c.l.b16 %v367
        %v571 = vunpack.c.l.b16 %v368
        %v572 = vunpack.c.l.b16 %v369
        %v573 = vunpack.c.l.b16 %v370
        %v574 = vunpack.c.l.b16 %v371
        %v575 = vunpack.c.l.b16 %v372
        %v576 = vunpack.c.l.b16 %v373
        %v577 = vunpack.c.l.b16 %v374
        %v578 = vunpack.c.l.b16 %v375
        %v579 = vunpack.c.l.b16 %v376
        %v580 = vunpack.c.l.b16 %v377
        %v581 = vunpack.c.l.b16 %v378
        %v582 = vunpack.c.l.b16 %v379
        %v583 = vunpack.c.l.b16 %v380
        %v584 = vunpack.c.l.b16 %v381
        %v585 = vunpack.c.l.b16 %v382
        %v586 = vunpack.c.l.b16 %v383
        %v587 = vunpack.c.l.b16 %v384
        %v588 = vunpack.c.l.b16 %v385
        %v589 = vunpack.c.l.b16 %v386
        %v590 = vunpack.c.l.b16 %v387
        %v591 = vunpack.c.l.b16 %v388
        %v592 = vunpack.c.l.b16 %v389
        %v593 = vunpack.c.l.b16 %v390
        %v594 = vunpack.c.l.b16 %v391
        %v595 = vunpack.c.l.b16 %v392
        %v596 = vunpack.c.l.b16 %v393
        %v597 = vunpack.c.l.b16 %v394
        %v598 = vunpack.c.l.b16 %v395
        %v599 = vunpack.c.l.b16 %v396
        %v600 = vunpack.c.l.b16 %v397
        %v601 = vunpack.c.l.b16 %v398
        %v602 = vunpack.c.l.b16 %v399
        %v603 = vunpack.c.l.b16 %v400
        %v604 = vunpack.c.l.b16 %v401
        %v605 = vunpack.c.l.b16 %v402
        %v606 = vunpack.c.l.b16 %v403
        %v607 = vunpack.c.l.b16 %v404
        %v608 = vunpack.c.l.b16 %v405
        %v609 = vunpack.c.l.b16 %v406
        %v610 = vunpack.c.l.b16 %v407
        %v611 = vunpack.c.l.b16 %v408
        %v612 = vunpack.c.l.b16 %v409
        %v613 = vunpack.c.l.b16 %v410
        %v614 = vunpack.c.l.b16 %v411
        %v615 = vpack.c.b16 %v518, %v517
        %v616 = vpack.c.b16 %v520, %v519
        %v617 = vpack.c.b16 %v522, %v521
        %v618 = vpack.c.b16 %v524, %v523
        %v619 = vpack.c.b16 %v526, %v525
        %v620 = vpack.c.b16 %v528, %v527
        %v621 = vpack.c.b16 %v530, %v529
        %v622 = vpack.c.b16 %v532, %v531
        %v623 = vpack.c.b16 %v534, %v533
        %v624 = vpack.c.b16 %v536, %v535
        %v625 = vpack.c.b16 %v538, %v537
        %v626 = vpack.c.b16 %v540, %v539
        %v627 = vpack.c.b16 %v542, %v541
        %v628 = vpack.c.b16 %v544, %v543
        %v629 = vpack.c.b16 %v546, %v545
        %v630 = vpack.c.b16 %v548, %v547
        %v631 = vpack.c.b16 %v550, %v549
        %v632 = vpack.c.b16 %v552, %v551
        %v633 = vpack.c.b16 %v554, %v553
        %v634 = vpack.c.b16 %v556, %v555
        %v635 = vpack.c.b16 %v558, %v557
        %v636 = vpack.c.b16 %v560, %v559
        %v637 = vpack.c.b16 %v562, %v561
        %v638 = vpack.c.b16 %v564, %v563
        %v639 = vpack.c.b16 %v566, %v565
        %v640 = vpack.c.b16 %v568, %v567
        %v641 = vpack.c.b16 %v570, %v569
        %v642 = vpack.c.b16 %v572, %v571
        %v643 = vpack.c.b16 %v574, %v573
        %v644 = vpack.c.b16 %v576, %v575
        %v645 = vpack.c.b16 %v578, %v577
        %v646 = vpack.c.b16 %v580, %v579
        %v647 = vpack.c.b16 %v582, %v581
        %v648 = vpack.c.b16 %v584, %v583
        %v649 = vpack.c.b16 %v586, %v585
        %v650 = vpack.c.b16 %v588, %v587
        %v651 = vpack.c.b16 %v590, %v589
        %v652 = vpack.c.b16 %v592, %v591
        %v653 = vpack.c.b16 %v594, %v593
        %v654 = vpack.c.b16 %v596, %v595
        %v655 = vpack.c.b16 %v598, %v597
        %v656 = vpack.c.b16 %v600, %v599
        %v657 = vpack.c.b16 %v602, %v601
        %v658 = vpack.c.b16 %v604, %v603
        %v659 = vpack.c.b16 %v606, %v605
        %v660 = vpack.c.b16 %v608, %v607
        %v661 = vpack.c.b16 %v610, %v609
        %v662 = vpack.c.b16 %v612, %v611
        %v663 = vpack.c.b16 %v614, %v613
        %vm713 = vcmask 130048
        %v715 = vsel %vm713, %v292, 0
        %v718 = vsel %vm713, %v299, 0
        %v721 = vsel %vm713, %v306, 0
        %v724 = vsel %vm713, %v313, 0
        %726 = vmatprep.subr.bf16.mxu0 0
        %727 = vmatpush1.bf16.msra.mxu0 %v622
        %728 = vmatprep.subr.bf16.mxu0 0
        %729 = vmatpush1.bf16.msra.mxu0 %v621
        %730 = vmatprep.subr.bf16.mxu0 0
        %731 = vmatpush1.bf16.msra.mxu0 %v620
        %732 = vmatprep.subr.bf16.mxu0 0
        %733 = vmatpush1.bf16.msra.mxu0 %v619
        %734 = vmatprep.subr.bf16.mxu0 0
        %735 = vmatpush1.bf16.msra.mxu0 %v618
        %736 = vmatprep.subr.bf16.mxu0 0
        %737 = vmatpush1.bf16.msra.mxu0 %v617
        %738 = vmatprep.subr.bf16.mxu0 0
        %739 = vmatpush1.bf16.msra.mxu0 %v616
        %740 = vmatprep.subr.bf16.mxu0 0
        %741 = vmatpush1.bf16.msra.mxu0 %v615
        %742 = vmatprep.subr.bf16.mxu0 0
        %743 = vmatpush2.bf16.msra.mxu0 %v630
        %744 = vmatprep.subr.bf16.mxu0 0
        %745 = vmatpush2.bf16.msra.mxu0 %v629
        %746 = vmatprep.subr.bf16.mxu0 0
        %747 = vmatpush2.bf16.msra.mxu0 %v628
        %748 = vmatprep.subr.bf16.mxu0 0
        %749 = vmatpush2.bf16.msra.mxu0 %v627
        %750 = vmatprep.subr.bf16.mxu0 0
        %751 = vmatpush2.bf16.msra.mxu0 %v626
        %752 = vmatprep.subr.bf16.mxu0 0
        %753 = vmatpush2.bf16.msra.mxu0 %v625
        %754 = vmatprep.subr.bf16.mxu0 0
        %755 = vmatpush2.bf16.msra.mxu0 %v624
        %756 = vmatprep.subr.bf16.mxu0 0
        %757 = vmatpush2.bf16.msra.mxu0 %v623
        %758 = vmatprep.mubr.bf16.mxu0 %v287
        %759 = vmatmul.mubr.bf16.gmra.mxu0 %v286
        %v760 = vpop.f32.mrf.mxu0
        %v761 = vadd.f32 %v417, %v760
        %v762 = vpop.f32.mrf.mxu0
        %v763 = vpop.f32.mrf.mxu0
        %v764 = vadd.f32 %v417, %v763
        %v765 = vpop.f32.mrf.mxu0
        %766 = vmatprep.mubr.bf16.mxu0 %v294
        %767 = vmatmul.mubr.bf16.gmra.mxu0 %v293
        %v768 = vpop.f32.mrf.mxu0
        %v769 = vadd.f32 %v417, %v768
        %v770 = vpop.f32.mrf.mxu0
        %v771 = vpop.f32.mrf.mxu0
        %v772 = vadd.f32 %v417, %v771
        %v773 = vpop.f32.mrf.mxu0
        %774 = vmatprep.mubr.bf16.mxu0 %v301
        %775 = vmatmul.mubr.bf16.gmra.mxu0 %v300
        %v776 = vpop.f32.mrf.mxu0
        %v777 = vadd.f32 %v417, %v776
        %v778 = vpop.f32.mrf.mxu0
        %v779 = vpop.f32.mrf.mxu0
        %v780 = vadd.f32 %v417, %v779
        %v781 = vpop.f32.mrf.mxu0
        %782 = vmatprep.mubr.bf16.mxu0 %v308
        %783 = vmatmul.mubr.bf16.gmra.mxu0 %v307
        %v784 = vpop.f32.mrf.mxu0
        %v785 = vadd.f32 %v417, %v784
        %v786 = vpop.f32.mrf.mxu0
        %v787 = vpop.f32.mrf.mxu0
        %v788 = vadd.f32 %v417, %v787
        %v789 = vpop.f32.mrf.mxu0
        %790 = vdwg.mxu0
        %791 = vmatprep.subr.bf16.mxu0 0
        %792 = vmatpush1.bf16.msra.mxu0 %v638
        %793 = vmatprep.subr.bf16.mxu0 0
        %794 = vmatpush1.bf16.msra.mxu0 %v637
        %795 = vmatprep.subr.bf16.mxu0 0
        %796 = vmatpush1.bf16.msra.mxu0 %v636
        %797 = vmatprep.subr.bf16.mxu0 0
        %798 = vmatpush1.bf16.msra.mxu0 %v635
        %799 = vmatprep.subr.bf16.mxu0 0
        %800 = vmatpush1.bf16.msra.mxu0 %v634
        %801 = vmatprep.subr.bf16.mxu0 0
        %802 = vmatpush1.bf16.msra.mxu0 %v633
        %803 = vmatprep.subr.bf16.mxu0 0
        %804 = vmatpush1.bf16.msra.mxu0 %v632
        %805 = vmatprep.subr.bf16.mxu0 0
        %806 = vmatpush1.bf16.msra.mxu0 %v631
        %807 = vmatprep.subr.bf16.mxu0 0
        %808 = vmatpush2.bf16.msra.mxu0 %v646
        %809 = vmatprep.subr.bf16.mxu0 0
        %810 = vmatpush2.bf16.msra.mxu0 %v645
        %811 = vmatprep.subr.bf16.mxu0 0
        %812 = vmatpush2.bf16.msra.mxu0 %v644
        %813 = vmatprep.subr.bf16.mxu0 0
        %814 = vmatpush2.bf16.msra.mxu0 %v643
        %815 = vmatprep.subr.bf16.mxu0 0
        %816 = vmatpush2.bf16.msra.mxu0 %v642
        %817 = vmatprep.subr.bf16.mxu0 0
        %818 = vmatpush2.bf16.msra.mxu0 %v641
        %819 = vmatprep.subr.bf16.mxu0 0
        %820 = vmatpush2.bf16.msra.mxu0 %v640
        %821 = vmatprep.subr.bf16.mxu0 0
        %822 = vmatpush2.bf16.msra.mxu0 %v639
        %823 = vmatprep.mubr.bf16.mxu0 %v289
        %824 = vmatmul.mubr.bf16.gmra.mxu0 %v288
        %v825 = vpop.f32.mrf.mxu0
        %v826 = vadd.f32 %v761, %v825
        %v827 = vpop.f32.mrf.mxu0
        %v828 = vpop.f32.mrf.mxu0
        %v829 = vadd.f32 %v764, %v828
        %v830 = vpop.f32.mrf.mxu0
        %831 = vmatprep.mubr.bf16.mxu0 %v296
        %832 = vmatmul.mubr.bf16.gmra.mxu0 %v295
        %v833 = vpop.f32.mrf.mxu0
        %v834 = vadd.f32 %v769, %v833
        %v835 = vpop.f32.mrf.mxu0
        %v836 = vpop.f32.mrf.mxu0
        %v837 = vadd.f32 %v772, %v836
        %v838 = vpop.f32.mrf.mxu0
        %839 = vmatprep.mubr.bf16.mxu0 %v303
        %840 = vmatmul.mubr.bf16.gmra.mxu0 %v302
        %v841 = vpop.f32.mrf.mxu0
        %v842 = vadd.f32 %v777, %v841
        %v843 = vpop.f32.mrf.mxu0
        %v844 = vpop.f32.mrf.mxu0
        %v845 = vadd.f32 %v780, %v844
        %v846 = vpop.f32.mrf.mxu0
        %847 = vmatprep.mubr.bf16.mxu0 %v310
        %848 = vmatmul.mubr.bf16.gmra.mxu0 %v309
        %v849 = vpop.f32.mrf.mxu0
        %v850 = vadd.f32 %v785, %v849
        %v851 = vpop.f32.mrf.mxu0
        %v852 = vpop.f32.mrf.mxu0
        %v853 = vadd.f32 %v788, %v852
        %v854 = vpop.f32.mrf.mxu0
        %855 = vdwg.mxu0
        %856 = vmatprep.subr.bf16.mxu0 0
        %857 = vmatpush1.bf16.msra.mxu0 %v654
        %858 = vmatprep.subr.bf16.mxu0 0
        %859 = vmatpush1.bf16.msra.mxu0 %v653
        %860 = vmatprep.subr.bf16.mxu0 0
        %861 = vmatpush1.bf16.msra.mxu0 %v652
        %862 = vmatprep.subr.bf16.mxu0 0
        %863 = vmatpush1.bf16.msra.mxu0 %v651
        %864 = vmatprep.subr.bf16.mxu0 0
        %865 = vmatpush1.bf16.msra.mxu0 %v650
        %866 = vmatprep.subr.bf16.mxu0 0
        %867 = vmatpush1.bf16.msra.mxu0 %v649
        %868 = vmatprep.subr.bf16.mxu0 0
        %869 = vmatpush1.bf16.msra.mxu0 %v648
        %870 = vmatprep.subr.bf16.mxu0 0
        %871 = vmatpush1.bf16.msra.mxu0 %v647
        %872 = vmatprep.subr.bf16.mxu0 0
        %873 = vmatpush2.bf16.msra.mxu0 %v662
        %874 = vmatprep.subr.bf16.mxu0 0
        %875 = vmatpush2.bf16.msra.mxu0 %v661
        %876 = vmatprep.subr.bf16.mxu0 0
        %877 = vmatpush2.bf16.msra.mxu0 %v660
        %878 = vmatprep.subr.bf16.mxu0 0
        %879 = vmatpush2.bf16.msra.mxu0 %v659
        %880 = vmatprep.subr.bf16.mxu0 0
        %881 = vmatpush2.bf16.msra.mxu0 %v658
        %882 = vmatprep.subr.bf16.mxu0 0
        %883 = vmatpush2.bf16.msra.mxu0 %v657
        %884 = vmatprep.subr.bf16.mxu0 0
        %885 = vmatpush2.bf16.msra.mxu0 %v656
        %886 = vmatprep.subr.bf16.mxu0 0
        %887 = vmatpush2.bf16.msra.mxu0 %v655
        %888 = vmatprep.mubr.bf16.mxu0 %v291
        %889 = vmatmul.mubr.bf16.gmra.mxu0 %v290
        %v890 = vpop.f32.mrf.mxu0
        %v891 = vadd.f32 %v826, %v890
        %v892 = vpop.f32.mrf.mxu0
        %v893 = vpop.f32.mrf.mxu0
        %v894 = vadd.f32 %v829, %v893
        %v895 = vpop.f32.mrf.mxu0
        %896 = vmatprep.mubr.bf16.mxu0 %v298
        %897 = vmatmul.mubr.bf16.gmra.mxu0 %v297
        %v898 = vpop.f32.mrf.mxu0
        %v899 = vadd.f32 %v834, %v898
        %v900 = vpop.f32.mrf.mxu0
        %v901 = vpop.f32.mrf.mxu0
        %v902 = vadd.f32 %v837, %v901
        %v903 = vpop.f32.mrf.mxu0
        %904 = vmatprep.mubr.bf16.mxu0 %v305
        %905 = vmatmul.mubr.bf16.gmra.mxu0 %v304
        %v906 = vpop.f32.mrf.mxu0
        %v907 = vadd.f32 %v842, %v906
        %v908 = vpop.f32.mrf.mxu0
        %v909 = vpop.f32.mrf.mxu0
        %v910 = vadd.f32 %v845, %v909
        %v911 = vpop.f32.mrf.mxu0
        %912 = vmatprep.mubr.bf16.mxu0 %v312
        %913 = vmatmul.mubr.bf16.gmra.mxu0 %v311
        %v914 = vpop.f32.mrf.mxu0
        %v915 = vadd.f32 %v850, %v914
        %v916 = vpop.f32.mrf.mxu0
        %v917 = vpop.f32.mrf.mxu0
        %v918 = vadd.f32 %v853, %v917
        %v919 = vpop.f32.mrf.mxu0
        %920 = vdwg.mxu0
        %921 = vmatprep.subr.bf16.mxu0 0
        %922 = vmatpush1.bf16.msra.mxu0 0
        %923 = vmatprep.subr.bf16.mxu0 0
        %924 = vmatpush1.bf16.msra.mxu0 0
        %925 = vmatprep.subr.bf16.mxu0 0
        %926 = vmatpush1.bf16.msra.mxu0 0
        %927 = vmatprep.subr.bf16.mxu0 0
        %928 = vmatpush1.bf16.msra.mxu0 0
        %929 = vmatprep.subr.bf16.mxu0 0
        %930 = vmatpush1.bf16.msra.mxu0 0
        %931 = vmatprep.subr.bf16.mxu0 0
        %932 = vmatpush1.bf16.msra.mxu0 0
        %933 = vmatprep.subr.bf16.mxu0 0
        %934 = vmatpush1.bf16.msra.mxu0 0
        %935 = vmatprep.subr.bf16.mxu0 0
        %936 = vmatpush1.bf16.msra.mxu0 %v663
        %937 = vmatprep.subr.bf16.mxu0 0
        %938 = vmatpush2.bf16.msra.mxu0 0
        %939 = vmatprep.subr.bf16.mxu0 0
        %940 = vmatpush2.bf16.msra.mxu0 0
        %941 = vmatprep.subr.bf16.mxu0 0
        %942 = vmatpush2.bf16.msra.mxu0 0
        %943 = vmatprep.subr.bf16.mxu0 0
        %944 = vmatpush2.bf16.msra.mxu0 0
        %945 = vmatprep.subr.bf16.mxu0 0
        %946 = vmatpush2.bf16.msra.mxu0 0
        %947 = vmatprep.subr.bf16.mxu0 0
        %948 = vmatpush2.bf16.msra.mxu0 0
        %949 = vmatprep.subr.bf16.mxu0 0
        %950 = vmatpush2.bf16.msra.mxu0 0
        %951 = vmatprep.subr.bf16.mxu0 0
        %952 = vmatpush2.bf16.msra.mxu0 0
        %953 = vmatprep.mubr.bf16.mxu0 0
        %954 = vmatmul.mubr.bf16.gmra.mxu0 %v715
        %v955 = vpop.f32.mrf.mxu0
        %v956 = vadd.f32 %v891, %v955
        %v957 = vpop.f32.mrf.mxu0
        %v958 = vpop.f32.mrf.mxu0
        %v959 = vadd.f32 %v894, %v958
        %v960 = vpop.f32.mrf.mxu0
        %961 = vmatprep.mubr.bf16.mxu0 0
        %962 = vmatmul.mubr.bf16.gmra.mxu0 %v718
        %v963 = vpop.f32.mrf.mxu0
        %v964 = vadd.f32 %v899, %v963
        %v965 = vpop.f32.mrf.mxu0
        %v966 = vpop.f32.mrf.mxu0
        %v967 = vadd.f32 %v902, %v966
        %v968 = vpop.f32.mrf.mxu0
        %969 = vmatprep.mubr.bf16.mxu0 0
        %970 = vmatmul.mubr.bf16.gmra.mxu0 %v721
        %v971 = vpop.f32.mrf.mxu0
        %v972 = vadd.f32 %v907, %v971
        %v973 = vpop.f32.mrf.mxu0
        %v974 = vpop.f32.mrf.mxu0
        %v975 = vadd.f32 %v910, %v974
        %v976 = vpop.f32.mrf.mxu0
        %977 = vmatprep.mubr.bf16.mxu0 0
        %978 = vmatmul.mubr.bf16.gmra.mxu0 %v724
        %v979 = vpop.f32.mrf.mxu0
        %v980 = vadd.f32 %v915, %v979
        %v981 = vpop.f32.mrf.mxu0
        %v982 = vpop.f32.mrf.mxu0
        %v983 = vadd.f32 %v918, %v982
        %v984 = vpop.f32.mrf.mxu0
        %985 = vdwg.mxu0
        %v986 = vmax.f32 %v956, 0.0
        %v987 = vmax.f32 %v959, 0.0
        %v988 = vmax.f32 %v964, 0.0
        %v989 = vmax.f32 %v967, 0.0
        %v990 = vmax.f32 %v972, 0.0
        %v991 = vmax.f32 %v975, 0.0
        %v992 = vmax.f32 %v980, 0.0
        %v993 = vmax.f32 %v983, 0.0
        %v994 = vpack.c.bf16 %v987, %v986
        %v995 = vpack.c.bf16 %v989, %v988
        %v996 = vpack.c.bf16 %v991, %v990
        %v997 = vpack.c.bf16 %v993, %v992
        %v998 = vld [vmem:[%s3] sm:$0xf]
        %v999 = vld [vmem:[%s3 + $0x4] sm:$0xf]
        %v1000 = vld [vmem:[%s3 + $0x8] sm:$0xf]
        %v1001 = vld [vmem:[%s3 + $0xc] sm:$0xf]
        %v1002 = vld [vmem:[%s3 + $0x10] sm:$0xf]
        %v1003 = vld [vmem:[%s3 + $0x14] sm:$0xf]
        %v1004 = vld [vmem:[%s3 + $0x18] sm:$0xf]
        %v1005 = vld [vmem:[%s3 + $0x1c] sm:$0xf]
        %v1006 = vld [vmem:[%s3 + $0x20] sm:$0xf]
        %v1007 = vld [vmem:[%s3 + $0x24] sm:$0xf]
        %v1008 = vld [vmem:[%s3 + $0x28] sm:$0xf]
        %v1009 = vld [vmem:[%s3 + $0x2c] sm:$0xf]
        %v1010 = vld [vmem:[%s3 + $0x30] sm:$0xf]
        %v1011 = vld [vmem:[%s3 + $0x34] sm:$0xf]
        %v1012 = vld [vmem:[%s3 + $0x38] sm:$0xf]
        %v1013 = vld [vmem:[%s3 + $0x3c] sm:$0xf]
        %v1014 = vld [vmem:[%s4] sm:$0x1]
        %v1016 = vlaneseq
        %v1017 = vshrl.u32 %v1016, 7
        %v1018 = vsub.s32 0, %v1017
        %v1019 = vrot.slane %v1014, %v1018
        %v1037 = vunpack.c.l.b16 %v998
        %v1038 = vunpack.c.l.b16 %v999
        %v1039 = vunpack.c.l.b16 %v1000
        %v1040 = vunpack.c.l.b16 %v1001
        %v1041 = vunpack.c.l.b16 %v1002
        %v1042 = vunpack.c.l.b16 %v1003
        %v1043 = vunpack.c.l.b16 %v1004
        %v1044 = vunpack.c.l.b16 %v1005
        %v1045 = vunpack.c.l.b16 %v1006
        %v1046 = vunpack.c.l.b16 %v1007
        %v1047 = vunpack.c.l.b16 %v1008
        %v1048 = vunpack.c.l.b16 %v1009
        %v1049 = vunpack.c.l.b16 %v1010
        %v1050 = vunpack.c.l.b16 %v1011
        %v1051 = vunpack.c.l.b16 %v1012
        %v1052 = vunpack.c.l.b16 %v1013
        %v1053 = vpack.c.b16 %v1038, %v1037
        %v1054 = vpack.c.b16 %v1040, %v1039
        %v1055 = vpack.c.b16 %v1042, %v1041
        %v1056 = vpack.c.b16 %v1044, %v1043
        %v1057 = vpack.c.b16 %v1046, %v1045
        %v1058 = vpack.c.b16 %v1048, %v1047
        %v1059 = vpack.c.b16 %v1050, %v1049
        %v1060 = vpack.c.b16 %v1052, %v1051
        %1069 = vmatprep.subr.bf16.mxu0 0
        %1070 = vmatpush1.bf16.msra.mxu0 %v1060
        %1071 = vmatprep.subr.bf16.mxu0 0
        %1072 = vmatpush1.bf16.msra.mxu0 %v1059
        %1073 = vmatprep.subr.bf16.mxu0 0
        %1074 = vmatpush1.bf16.msra.mxu0 %v1058
        %1075 = vmatprep.subr.bf16.mxu0 0
        %1076 = vmatpush1.bf16.msra.mxu0 %v1057
        %1077 = vmatprep.subr.bf16.mxu0 0
        %1078 = vmatpush1.bf16.msra.mxu0 %v1056
        %1079 = vmatprep.subr.bf16.mxu0 0
        %1080 = vmatpush1.bf16.msra.mxu0 %v1055
        %1081 = vmatprep.subr.bf16.mxu0 0
        %1082 = vmatpush1.bf16.msra.mxu0 %v1054
        %1083 = vmatprep.subr.bf16.mxu0 0
        %1084 = vmatpush1.bf16.msra.mxu0 %v1053
        %1085 = vmatprep.subr.bf16.mxu0 0
        %1086 = vmatpush2.bf16.msra.mxu0 0
        %1087 = vmatprep.subr.bf16.mxu0 0
        %1088 = vmatpush2.bf16.msra.mxu0 0
        %1089 = vmatprep.subr.bf16.mxu0 0
        %1090 = vmatpush2.bf16.msra.mxu0 0
        %1091 = vmatprep.subr.bf16.mxu0 0
        %1092 = vmatpush2.bf16.msra.mxu0 0
        %1093 = vmatprep.subr.bf16.mxu0 0
        %1094 = vmatpush2.bf16.msra.mxu0 0
        %1095 = vmatprep.subr.bf16.mxu0 0
        %1096 = vmatpush2.bf16.msra.mxu0 0
        %1097 = vmatprep.subr.bf16.mxu0 0
        %1098 = vmatpush2.bf16.msra.mxu0 0
        %1099 = vmatprep.subr.bf16.mxu0 0
        %1100 = vmatpush2.bf16.msra.mxu0 0
        %1101 = vmatprep.mubr.bf16.mxu0 0
        %1102 = vmatmul.mubr.bf16.gmra.mxu0 %v994
        %v1103 = vpop.f32.mrf.mxu0
        %v1104 = vadd.f32 %v1019, %v1103
        %v1105 = vpop.f32.mrf.mxu0
        %v1106 = vpop.f32.mrf.mxu0
        %v1107 = vadd.f32 %v1019, %v1106
        %v1108 = vpop.f32.mrf.mxu0
        %1109 = vmatprep.mubr.bf16.mxu0 0
        %1110 = vmatmul.mubr.bf16.gmra.mxu0 %v995
        %v1111 = vpop.f32.mrf.mxu0
        %v1112 = vadd.f32 %v1019, %v1111
        %v1113 = vpop.f32.mrf.mxu0
        %v1114 = vpop.f32.mrf.mxu0
        %v1115 = vadd.f32 %v1019, %v1114
        %v1116 = vpop.f32.mrf.mxu0
        %1117 = vmatprep.mubr.bf16.mxu0 0
        %1118 = vmatmul.mubr.bf16.gmra.mxu0 %v996
        %v1119 = vpop.f32.mrf.mxu0
        %v1120 = vadd.f32 %v1019, %v1119
        %v1121 = vpop.f32.mrf.mxu0
        %v1122 = vpop.f32.mrf.mxu0
        %v1123 = vadd.f32 %v1019, %v1122
        %v1124 = vpop.f32.mrf.mxu0
        %1125 = vmatprep.mubr.bf16.mxu0 0
        %1126 = vmatmul.mubr.bf16.gmra.mxu0 %v997
        %v1127 = vpop.f32.mrf.mxu0
        %v1128 = vadd.f32 %v1019, %v1127
        %v1129 = vpop.f32.mrf.mxu0
        %v1130 = vpop.f32.mrf.mxu0
        %v1131 = vadd.f32 %v1019, %v1130
        %v1132 = vpop.f32.mrf.mxu0
        %1133 = vdwg.mxu0
        %v1134 = vpack.c.bf16 %v1107, %v1104
        %v1135 = vpack.c.bf16 %v1115, %v1112
        %v1136 = vpack.c.bf16 %v1123, %v1120
        %v1137 = vpack.c.bf16 %v1131, %v1128
        %v1142 = vunpack.c.l.b16 %v1134
        %v1143 = vunpack.c.h.b16 %v1134
        %v1144 = vunpack.c.l.b16 %v1135
        %v1145 = vunpack.c.h.b16 %v1135
        %v1146 = vunpack.c.l.b16 %v1136
        %v1147 = vunpack.c.h.b16 %v1136
        %v1148 = vunpack.c.l.b16 %v1137
        %v1149 = vunpack.c.h.b16 %v1137
        %v1150 = vpack.c.b16 %v1142, %v1142
        %v1151 = vpack.c.b16 %v1143, %v1143
        %v1152 = vpack.c.b16 %v1144, %v1144
        %v1153 = vpack.c.b16 %v1145, %v1145
        %v1154 = vpack.c.b16 %v1146, %v1146
        %v1155 = vpack.c.b16 %v1147, %v1147
        %v1156 = vpack.c.b16 %v1148, %v1148
        %v1157 = vpack.c.b16 %v1149, %v1149
        %1166 = vst [vmem:[%s220] sm:$0xf] %v1150
        %1167 = vst [vmem:[%s220 + $0x4] sm:$0xf] %v1151
        %1168 = vst [vmem:[%s220 + $0x8] sm:$0xf] %v1152
        %1169 = vst [vmem:[%s220 + $0xc] sm:$0xf] %v1153
        %1170 = vst [vmem:[%s220 + $0x10] sm:$0xf] %v1154
        %1171 = vst [vmem:[%s220 + $0x14] sm:$0xf] %v1155
        %1172 = vst [vmem:[%s220 + $0x18] sm:$0xf] %v1156
        %1173 = vst [vmem:[%s220 + $0x1c] sm:$0xf] %v1157
        %s1174 = sand.u32 %s137, 1
        %s1175 = scalar_lea.sflag [#allocation3], %s1174
        %s1176 = sand.u32 %s137, 1
        %s1177 = smul.addr %s1176, 32
        %s1178 = scalar_lea.vmem [#allocation2], %s1177
        // Predicated region
        $region41: #{tpu_custom_call.1} parent=39 // pred_check
          %p1179 = pneg %p147
        $region42: #{tpu_custom_call.1} parent=39 // pred_check_branch
          %1181 = sbr.rel (%p1179) target = $region44
        $region43: #{tpu_custom_call.1} parent=39 // pred_region
          %s1182 = smul.u32 8, %s19
          %s1184 = ssub.s32 512, 512
          %1185 = vsyncadd %s1175, %s1184
          %s1186 = smul.addr %s1182, 64
          %s1187 = scalar_lea.hbm %s5, %s1186
          %s1188 = sshll.u32 %s1178, 4
          %s1189 = int_to_ptr.vmem [resolvable:$true] %s1188
          %1194 = dma.vmem_to_hbm [thread:$0]  %s1189, 512, %s1187, %s1175, 64, 64, 4
        $region44: #{tpu_custom_call.1} parent=39 // pred_fallthru
          _
      $region40: #{tpu_custom_call.1} parent=5 // pred_fallthru
        _
      %p1195 = scmp.le.s32.totalorder 2, %s14
      // Predicated region
      $region45: #{tpu_custom_call.1} parent=5 // pred_check
        %p1196 = pneg %p1195
      $region46: #{tpu_custom_call.1} parent=5 // pred_check_branch
        %1198 = sbr.rel (%p1196) target = $region48
      $region47: #{tpu_custom_call.1} parent=5 // pred_region
        %s1199 = ssub.s32 %s14, 2
        // Predicated region
        $region49: #{tpu_custom_call.1} parent=47 // pred_check
          %p1200 = pneg %p153
        $region50: #{tpu_custom_call.1} parent=47 // pred_check_branch
          %1202 = sbr.rel (%p1200) target = $region52
        $region51: #{tpu_custom_call.1} parent=47 // pred_region
          %s1203 = sand.u32 %s138, 1
          %s1204 = scalar_lea.sflag [#allocation3], %s1203
          %s1205 = sand.u32 %s138, 1
          %s1206 = smul.addr %s1205, 32
          %s1207 = scalar_lea.vmem [#allocation2], %s1206
          %1208 = dma.done %s1204, 512
        $region52: #{tpu_custom_call.1} parent=47 // pred_fallthru
          _
      $region48: #{tpu_custom_call.1} parent=5 // pred_fallthru
        _
    $region6: #{tpu_custom_call.1} parent=1 // loop_footer
      %s18 = sadd.s32 1, %s14
    $region7: #{tpu_custom_call.1} parent=1 // loop_footer_branch
      %13 = sbr.rel target = $region3
    $region8: #{tpu_custom_call.1} parent=1 // loop_exit
      _
    %1209 = vsyncpa [#allocation3], 1
    %s1210 = scalar_lea.sflag [#allocation3], 1
    %1211 = vsyncpa %s1210, 1

</llo_original>
